<compile_context>
chip_gen: v6e
topology: v6e:2x2x1
jax: 0.10.0
libtpu: 0.0.40
codegen_flags: <defaults>
</compile_context>

<pallas_src>
import functools

import jax
import jax.numpy as jnp
from jax.experimental import pallas as pl
from jax.experimental.pallas import tpu as pltpu


def _round_up(x, m):
    return (x + m - 1) // m * m


# ---------------------------------------------------------------------------
# Kernels
# ---------------------------------------------------------------------------
def _linear_kernel_fused_k(x_ref, w_ref, b_ref, o_ref, *, compute_dtype):
    """Whole K resident per tile: one MXU dot, bias added in the epilogue."""
    xv = x_ref[...]
    wv = w_ref[...]
    if compute_dtype is not None:
        xv = xv.astype(compute_dtype)
        wv = wv.astype(compute_dtype)
    acc = jnp.dot(xv, wv, preferred_element_type=jnp.float32)
    o_ref[...] = (acc + b_ref[...]).astype(o_ref.dtype)


def _linear_kernel_split_k(x_ref, w_ref, b_ref, o_ref, acc_ref, *, compute_dtype):
    """K tiled on grid axis 2; bias folded into the k == 0 accumulator init."""
    k = pl.program_id(2)

    @pl.when(k == 0)
    def _():
        acc_ref[...] = jnp.broadcast_to(b_ref[...], acc_ref.shape)

    xv = x_ref[...]
    wv = w_ref[...]
    if compute_dtype is not None:
        xv = xv.astype(compute_dtype)
        wv = wv.astype(compute_dtype)
    acc_ref[...] += jnp.dot(xv, wv, preferred_element_type=jnp.float32)

    @pl.when(k == pl.num_programs(2) - 1)
    def _():
        o_ref[...] = acc_ref[...].astype(o_ref.dtype)


# ---------------------------------------------------------------------------
# Tiling helpers (all trace-time Python)
# ---------------------------------------------------------------------------
def _vmem_budget():
    """Returns (vmem_limit_bytes to request, tile byte budget)."""
    try:
        cap = getattr(pltpu.get_tpu_info(), "vmem_capacity_bytes", None)
    except Exception:
        cap = None
    if not cap:
        cap = 64 << 20  # conservative: assume v7x-sized VMEM (64 MiB / TC)
    # Request at most half of physical VMEM (capped at 64 MiB) as our scoped
    # limit -> 32 MiB on v7x, 64 MiB on v5e/v6e.  Keep 25% free for compiler
    # scratch / pipelining slack when sizing tiles.
    vmem_limit = int(min(cap // 2, 64 << 20))
    return vmem_limit, (vmem_limit * 3) // 4


def _tile_bytes(tm, tn, tk, in_bytes, out_bytes, split_k):
    f = 2 * tm * tk * in_bytes          # double-buffered x tile
    f += 2 * tk * tn * in_bytes         # double-buffered w tile
    f += 2 * tn * 4                     # double-buffered bias tile (f32)
    f += 2 * tm * tn * out_bytes        # double-buffered out tile
    if split_k:
        f += tm * tn * 4                # f32 accumulator scratch
    return f


def _choose_tiles(M, N, K, in_bytes, out_bytes, sub, budget, collapse_k):
    # --- M tile candidates (prefer divisors of M -> no padding) -------------
    if M % sub == 0:
        divs = [t for t in (512, 256, 128, 64, 32, 16, 8)
                if t % sub == 0 and t <= M and M % t == 0]
        if M <= 512 and M not in divs:
            divs = [M] + divs
        if divs and (divs[0] >= 128 or M <= 512):
            tm_cands = divs
        else:  # only tiny divisors exist for a large M -> accept padding
            tm_cands = [t for t in (512, 256, 128) if t % sub == 0]
    elif M <= 512:
        tm_cands = [M]                  # full-extent block, no padding
    else:
        tm_cands = [t for t in (512, 256, 128) if t % sub == 0]   # pads M
    # --- N tile candidates (lane-dense, prefer divisors of N) ---------------
    if N % 128 == 0:
        tn_cands = [t for t in (1024, 512, 256, 128) if N % t == 0]
    elif N <= 1024:
        tn_cands = [N]                  # full-extent block, no padding
    else:
        tn_cands = [512, 256, 128]      # pads N
    # --- K residency ---------------------------------------------------------
    if collapse_k:
        tk_cands = [K]
    else:
        tk_cands = [t for t in (4096, 2048, 1024, 512) if K % t == 0] or [1024]

    for tm in tm_cands:                 # priority: big tm (cuts w re-stream),
        for tn in tn_cands:             # then big tn, then big tk
            for tk in tk_cands:
                if _tile_bytes(tm, tn, tk, in_bytes, out_bytes,
                               not collapse_k) <= budget:
                    return tm, tn, tk
    return tm_cands[-1], tn_cands[-1], tk_cands[-1]


# ---------------------------------------------------------------------------
# Public wrapper
# ---------------------------------------------------------------------------
@functools.partial(jax.jit, static_argnames=("compute_dtype", "force_pallas"))
def linear(x, w, b, *, compute_dtype=None, force_pallas=False):
    """y = x @ w + b as a Pallas TPU kernel.

    compute_dtype: optional dtype (e.g. jnp.bfloat16) the matmul operands are
      cast to *inside the kernel* (f32 accumulation is kept).  Feed bf16 x/w
      directly to additionally halve HBM bytes.
    """
    M, K = x.shape
    K2, N = w.shape
    assert K == K2 and b.shape == (N,)

    out_dtype = x.dtype
    in_bytes = jnp.dtype(x.dtype).itemsize
    out_bytes = jnp.dtype(out_dtype).itemsize
    cd = None if compute_dtype is None else jnp.dtype(compute_dtype)
    # Sublane packing multiple: 8 rows for 32-bit dtypes, 16 for 16-bit.
    sub = 8 if in_bytes >= 4 else 16

    vmem_limit, tile_budget = _vmem_budget()

    K_COLLAPSE_LIMIT = 2048
    collapse_k = K <= K_COLLAPSE_LIMIT

    tm, tn, tk = _choose_tiles(M, N, K, in_bytes, out_bytes, sub,
                               tile_budget, collapse_k)

    Mp = _round_up(M, tm)
    Np = _round_up(N, tn)
    Kp = K if collapse_k else _round_up(K, tk)
    gm, gn = Mp // tm, Np // tn
    gk = 1 if collapse_k else Kp // tk

    # Tiny problems: a (1,1) grid gets no pipelining and no megacore sharding;
    # plain XLA is strictly faster than paying pallas_call fixed overhead.
    if not force_pallas and collapse_k and gm * gn == 1:
        if cd is not None:
            y = jnp.dot(x.astype(cd), w.astype(cd),
                        preferred_element_type=jnp.float32)
        else:
            y = jnp.dot(x, w, preferred_element_type=jnp.float32)
        return (y + b.astype(jnp.float32)[None, :]).astype(out_dtype)

    # Guarantee >= 2 parallel output tiles so a megacore part (v7x, 2 TCs) can
    # shard the grid.  Only done when it keeps exact divisibility (no new pad).
    if gm * gn < 2:
        if tn % 256 == 0:
            tn //= 2
        elif tm % (2 * sub) == 0:
            tm //= 2
        gm, gn = Mp // tm, Np // tn

    # Zero padding only fires for ragged shapes the tile choice could not
    # divide; padded rows/cols contribute nothing and are sliced off below.
    # TODO(synk): for inference, pre-pad / pre-cast the weight once outside.
    if (Mp, Kp) != (M, K):
        x = jnp.pad(x, ((0, Mp - M), (0, Kp - K)))
    if (Kp, Np) != (K, N):
        w = jnp.pad(w, ((0, Kp - K), (0, Np - N)))
    b2d = b.astype(jnp.float32)
    if Np != N:
        b2d = jnp.pad(b2d, (0, Np - N))
    b2d = b2d.reshape(1, Np)

    # Stationary-operand choice: keep resident whichever of x / w makes total
    # HBM traffic smaller; the other is re-streamed across the inner axis.
    x_stationary = (M * K + gm * K * N) <= (gn * M * K + K * N)

    if collapse_k:
        x_hbm = M * K if x_stationary else gn * M * K
        w_hbm = gm * K * N if x_stationary else K * N
    else:
        x_hbm = gn * M * K
        w_hbm = gm * K * N
    cost = pl.CostEstimate(
        flops=2 * M * N * K,
        transcendentals=0,
        bytes_accessed=(x_hbm + w_hbm) * in_bytes + N * 4 + M * N * out_bytes,
    )

    if collapse_k:
        kern = functools.partial(_linear_kernel_fused_k, compute_dtype=cd)
        if x_stationary:
            grid = (gm, gn)
            x_map = lambda i, j: (i, 0)
            w_map = lambda i, j: (0, j)
            b_map = lambda i, j: (0, j)
            o_map = lambda i, j: (i, j)
        else:  # w stationary: w block index constant along the inner axis
            grid = (gn, gm)
            x_map = lambda j, i: (i, 0)
            w_map = lambda j, i: (0, j)
            b_map = lambda j, i: (0, j)
            o_map = lambda j, i: (i, j)
        out = pl.pallas_call(
            kern,
            out_shape=jax.ShapeDtypeStruct((Mp, Np), out_dtype),
            grid_spec=pltpu.PrefetchScalarGridSpec(
                num_scalar_prefetch=0,
                grid=grid,
                in_specs=[
                    pl.BlockSpec((tm, Kp), x_map),   # x tile
                    pl.BlockSpec((Kp, tn), w_map),   # w tile
                    pl.BlockSpec((1, tn), b_map),    # bias tile
                ],
                out_specs=pl.BlockSpec((tm, tn), o_map),
            ),
            compiler_params=pltpu.CompilerParams(
                dimension_semantics=("parallel", "parallel"),
                vmem_limit_bytes=vmem_limit,
            ),
            cost_estimate=cost,
        )(x, w, b2d)
    else:
        kern = functools.partial(_linear_kernel_split_k, compute_dtype=cd)
        out = pl.pallas_call(
            kern,
            out_shape=jax.ShapeDtypeStruct((Mp, Np), out_dtype),
            grid_spec=pltpu.PrefetchScalarGridSpec(
                num_scalar_prefetch=0,
                grid=(gm, gn, gk),
                in_specs=[
                    pl.BlockSpec((tm, tk), lambda i, j, k: (i, k)),  # x tile
                    pl.BlockSpec((tk, tn), lambda i, j, k: (k, j)),  # w tile
                    pl.BlockSpec((1, tn), lambda i, j, k: (0, j)),   # bias tile
                ],
                out_specs=pl.BlockSpec((tm, tn), lambda i, j, k: (i, j)),
                scratch_shapes=[pltpu.VMEM((tm, tn), jnp.float32)],
            ),
            compiler_params=pltpu.CompilerParams(
                dimension_semantics=("parallel", "parallel", "arbitrary"),
                vmem_limit_bytes=vmem_limit,
            ),
            cost_estimate=cost,
        )(x, w, b2d)

    if (Mp, Np) != (M, N):
        out = out[:M, :N]
    return out


if __name__ == "__main__":
    key = jax.random.PRNGKey(0)
    kx, kw, kb = jax.random.split(key, 3)

    # Module config: Linear(in_features=32, out_features=128), batch=8.
    in_features, out_features, batch = 32, 128, 8
    x = jax.random.normal(kx, (batch, in_features), dtype=jnp.float32)
    w = jax.random.normal(kw, (in_features, out_features), dtype=jnp.float32)
    b = jax.random.normal(kb, (out_features,), dtype=jnp.float32)
    y_ref = x @ w + b[None, :]

    # (a) f32 Pallas path (force_pallas so the tiny grid still runs the kernel).
    y = linear(x, w, b, force_pallas=True)
    jax.block_until_ready(y)
    assert y.shape == (batch, out_features)
    assert jnp.allclose(y, y_ref, atol=1e-5, rtol=1e-5)

    # (b) bf16-compute path (f32 in/out, bf16 MXU operands, f32 accumulation).
    y_bf = linear(x, w, b, compute_dtype=jnp.bfloat16, force_pallas=True)
    jax.block_until_ready(y_bf)
    y_ref_bf = (
        jnp.dot(x.astype(jnp.bfloat16), w.astype(jnp.bfloat16),
                preferred_element_type=jnp.float32)
        + b[None, :]
    )
    assert jnp.allclose(y_bf, y_ref_bf, atol=1e-2, rtol=1e-2)

    # (c) multi-tile fused-K case (exercises the tiled parallel grid + the
    #     stationary-operand swap).
    ka, kb2, kc = jax.random.split(jax.random.PRNGKey(1), 3)
    x2 = jax.random.normal(ka, (1024, 256), dtype=jnp.float32)
    w2 = jax.random.normal(kb2, (256, 1024), dtype=jnp.float32)
    b2 = jax.random.normal(kc, (1024,), dtype=jnp.float32)
    y2 = linear(x2, w2, b2)
    jax.block_until_ready(y2)
    y2_ref = jnp.dot(x2, w2, precision=jax.lax.Precision.HIGHEST) + b2[None, :]
    assert jnp.allclose(y2, y2_ref, atol=0.3, rtol=2e-2)

    # (d) split-K reduction path (K > 2048).
    kd, ke, kf = jax.random.split(jax.random.PRNGKey(2), 3)
    x3 = jax.random.normal(kd, (64, 4096), dtype=jnp.float32)
    w3 = jax.random.normal(ke, (4096, 256), dtype=jnp.float32)
    b3 = jax.random.normal(kf, (256,), dtype=jnp.float32)
    y3 = linear(x3, w3, b3)
    jax.block_until_ready(y3)
    y3_ref = jnp.dot(x3, w3, precision=jax.lax.Precision.HIGHEST) + b3[None, :]
    assert jnp.allclose(y3, y3_ref, atol=1.0, rtol=2e-2)

    print("KERNEL_OK")
</pallas_src>

<mosaic_0001>
module attributes {stable_mosaic.version = 11 : i64} {
  func.func @_linear_kernel_fused_k(%arg0: i32, %arg1: i32, %arg2: memref<8x32xf32, #tpu.memory_space<vmem>>, %arg3: memref<32x128xf32, #tpu.memory_space<vmem>>, %arg4: memref<1x128xf32, #tpu.memory_space<vmem>>, %arg5: memref<8x128xf32, #tpu.memory_space<vmem>>) attributes {dimension_semantics = [#tpu.dimension_semantics<parallel>, #tpu.dimension_semantics<parallel>], iteration_bounds = array<i64: 1, 1>, scalar_prefetch = 0 : i64, scratch_operands = 0 : i64, tpu.core_type = #tpu.core_type<tc>, window_params = [{transform_indices = @transform_0, window_bounds = array<i64: 8, 32>}, {transform_indices = @transform_1, window_bounds = array<i64: 32, 128>}, {transform_indices = @transform_2, window_bounds = array<i64: 1, 128>}, {transform_indices = @transform_3, window_bounds = array<i64: 8, 128>}]} {
    %c0 = arith.constant 0 : index
    %c0_0 = arith.constant 0 : index
    %0 = vector.load %arg2[%c0, %c0_0] : memref<8x32xf32, #tpu.memory_space<vmem>>, vector<8x32xf32>
    %c0_1 = arith.constant 0 : index
    %c0_2 = arith.constant 0 : index
    %1 = vector.load %arg3[%c0_1, %c0_2] : memref<32x128xf32, #tpu.memory_space<vmem>>, vector<32x128xf32>
    %cst = arith.constant dense<0.000000e+00> : vector<8x128xf32>
    %2 = tpu.matmul %0, %1, %cst {dimension_numbers = #tpu.dot_dimension_numbers<[1], [0], [0], [1], [0, 0, 1, 1], [], []>} : vector<8x32xf32>, vector<32x128xf32>, vector<8x128xf32> -> vector<8x128xf32>
    %c0_3 = arith.constant 0 : index
    %c0_4 = arith.constant 0 : index
    %3 = vector.load %arg4[%c0_3, %c0_4] : memref<1x128xf32, #tpu.memory_space<vmem>>, vector<1x128xf32>
    %4 = vector.broadcast %3 : vector<1x128xf32> to vector<8x128xf32>
    %5 = arith.addf %2, %4 : vector<8x128xf32>
    %c0_5 = arith.constant 0 : index
    %c0_6 = arith.constant 0 : index
    %6 = vector.load %arg5[%c0_5, %c0_6] : memref<8x128xf32, #tpu.memory_space<vmem>>, vector<8x128xf32>
    tpu.vector_store %arg5[%c0_5, %c0_6], %5 {strides = array<i32>} : memref<8x128xf32, #tpu.memory_space<vmem>>, vector<8x128xf32>,
    return
  }
  func.func @transform_0(%arg0: i32, %arg1: i32) -> (i32, i32) {
    %c0_i32 = arith.constant 0 : i32
    %c0_i32_0 = arith.constant 0 : i32
    return %arg0, %c0_i32 : i32, i32
  }
  func.func @transform_1(%arg0: i32, %arg1: i32) -> (i32, i32) {
    %c0_i32 = arith.constant 0 : i32
    %c0_i32_0 = arith.constant 0 : i32
    return %c0_i32, %arg1 : i32, i32
  }
  func.func @transform_2(%arg0: i32, %arg1: i32) -> (i32, i32) {
    %c0_i32 = arith.constant 0 : i32
    %c0_i32_0 = arith.constant 0 : i32
    return %c0_i32, %arg1 : i32, i32
  }
  func.func @transform_3(%arg0: i32, %arg1: i32) -> (i32, i32) {
    %c0_i32 = arith.constant 0 : i32
    return %arg0, %arg1 : i32, i32
  }
}

</mosaic_0001>

<llo_original>
// kernel: linear.1
$region0: #{linear.1}
  #allocation0 [shape = 'u32[]', space=smem, size = 0x4, offset = 0x4, fixed_abs, tag = 'smem constant byte address 0x4 - core index']
  #allocation1 [shape = 'u32[144,128]{1,0:T(1,128)}', space=vmem, size = 0x12000, scoped, tag = 'internal scratch']
  %s0 = inlined_call_operand.hbm [shape: f32[8,32], index: 0, kind: input, shape index: {}]
  %s1 = inlined_call_operand.hbm [shape: f32[32,128], index: 1, kind: input, shape index: {}]
  %s2 = inlined_call_operand.vmem [shape: f32[1,128], index: 2, kind: input, shape index: {}]
  %s3 = inlined_call_operand.hbm [shape: f32[8,128], index: 3, kind: output, shape index: {}]
  %s4 = sld [smem:[#allocation0]]
  $region30: #{linear.1} parent=0
    _
  %s6 = ssub.s32 1, %s4
  %s7 = scalar_select 0, %s6, %s4
  $region1: #{linear.1} parent=0
    #allocation2 [shape = 'u8[4096]{0}', space=vmem, size = 0x1000, scoped, tag = 'input window, operand 0, single buffered']
    #allocation3 [shape = 's32[1]{0}', space=sflag, size = 0x4, scoped, tag = 'scoped memory for linear.1']
    #allocation4 [shape = 's32[1]{0}', space=sflag, size = 0x4, scoped, tag = 'scoped memory for linear.1']
    #allocation5 [shape = 'u8[16384]{0}', space=vmem, size = 0x4000, scoped, tag = 'input window, operand 1, single buffered']
    #allocation6 [shape = 's32[1]{0}', space=sflag, size = 0x4, scoped, tag = 'scoped memory for linear.1']
    #allocation7 [shape = 'u8[4096]{0}', space=vmem, size = 0x1000, scoped, tag = 'output window, operand 0, single buffered']
    %8 = vsyncpa [#allocation3], 0
    %9 = vsyncpa [#allocation6], 0
    %10 = vsyncpa [#allocation4], 0
    // Predicated region
    $region2: #{linear.1} parent=1 // pred_check
      _
    $region3: #{linear.1} parent=1 // pred_check_branch
      %12 = sbr.rel (0) target = $region5
    $region4: #{linear.1} parent=1 // pred_region
      %s14 = ssub.s32 128, 128
      %15 = vsyncadd [#allocation3], %s14
      %s17 = sshll.u32 [#allocation2], 4
      %s18 = int_to_ptr.vmem [resolvable:$true] %s17
      %20 = dma.hbm_to_vmem [thread:$0]  %s0, 128, %s18, [#allocation3]
    $region5: #{linear.1} parent=1 // pred_fallthru
      _
    // Predicated region
    $region6: #{linear.1} parent=1 // pred_check
      _
    $region7: #{linear.1} parent=1 // pred_check_branch
      %22 = sbr.rel (0) target = $region9
    $region8: #{linear.1} parent=1 // pred_region
      %s24 = ssub.s32 512, 512
      %25 = vsyncadd [#allocation6], %s24
      %s26 = sshll.u32 [#allocation5], 4
      %s27 = int_to_ptr.vmem [resolvable:$true] %s26
      %32 = dma.hbm_to_vmem [thread:$0]  %s1, 512, %s27, [#allocation6], 128, 128, 8
    $region9: #{linear.1} parent=1 // pred_fallthru
      _
    // Predicated region
    $region10: #{linear.1} parent=1 // pred_check
      _
    $region11: #{linear.1} parent=1 // pred_check_branch
      %34 = sbr.rel (0) target = $region13
    $region12: #{linear.1} parent=1 // pred_region
      _
    $region13: #{linear.1} parent=1 // pred_fallthru
      _
    // Predicated region
    $region14: #{linear.1} parent=1 // pred_check
      _
    $region15: #{linear.1} parent=1 // pred_check_branch
      %36 = sbr.rel (0) target = $region17
    $region16: #{linear.1} parent=1 // pred_region
      %37 = dma.done [#allocation3], 128
    $region17: #{linear.1} parent=1 // pred_fallthru
      _
    // Predicated region
    $region18: #{linear.1} parent=1 // pred_check
      _
    $region19: #{linear.1} parent=1 // pred_check_branch
      %39 = sbr.rel (0) target = $region21
    $region20: #{linear.1} parent=1 // pred_region
      %40 = dma.done [#allocation6], 512
    $region21: #{linear.1} parent=1 // pred_fallthru
      _
    %v41 = vld [vmem:[#allocation2] sm:$0xff]
    %v42 = vld [vmem:[#allocation5] sm:$0xff]
    %v43 = vld [vmem:[#allocation5 + $0x8] sm:$0xff]
    %v44 = vld [vmem:[#allocation5 + $0x10] sm:$0xff]
    %v45 = vld [vmem:[#allocation5 + $0x18] sm:$0xff]
    %v46 = vld [vmem:[%s2] sm:$0x1]
    %v48 = vlaneseq
    %v49 = vshrl.u32 %v48, 7
    %v50 = vsub.s32 0, %v49
    %v51 = vrot.slane %v46, %v50
    %vm53 = vcmask 261120
    %v55 = vsel %vm53, %v41, 0
    %57 = vmatprep.subr.mxu0 0.0
    %58 = vmatpush1.msra.mxu0 0.0
    %59 = vmatprep.subr.mxu0 0.0
    %60 = vmatpush1.msra.mxu0 0.0
    %61 = vmatprep.subr.mxu0 0.0
    %62 = vmatpush1.msra.mxu0 0.0
    %63 = vmatprep.subr.mxu0 0.0
    %64 = vmatpush1.msra.mxu0 0.0
    %65 = vmatprep.subr.mxu0 0.0
    %66 = vmatpush1.msra.mxu0 0.0
    %67 = vmatprep.subr.mxu0 0.0
    %68 = vmatpush1.msra.mxu0 0.0
    %69 = vmatprep.subr.mxu0 0.0
    %70 = vmatpush1.msra.mxu0 0.0
    %71 = vmatprep.subr.mxu0 0.0
    %72 = vmatpush1.msra.mxu0 0.0
    %73 = vmatprep.subr.mxu0 0.0
    %74 = vmatpush1.msra.mxu0 0.0
    %75 = vmatprep.subr.mxu0 0.0
    %76 = vmatpush1.msra.mxu0 0.0
    %77 = vmatprep.subr.mxu0 0.0
    %78 = vmatpush1.msra.mxu0 0.0
    %79 = vmatprep.subr.mxu0 0.0
    %80 = vmatpush1.msra.mxu0 0.0
    %81 = vmatprep.subr.mxu0 0.0
    %82 = vmatpush1.msra.mxu0 %v45
    %83 = vmatprep.subr.mxu0 0.0
    %84 = vmatpush1.msra.mxu0 %v44
    %85 = vmatprep.subr.mxu0 0.0
    %86 = vmatpush1.msra.mxu0 %v43
    %87 = vmatprep.subr.mxu0 0.0
    %88 = vmatpush1.msra.mxu0 %v42
    %89 = vmatprep.subr.mxu0 0.0
    %90 = vmatpush2.msra.mxu0 0.0
    %91 = vmatprep.subr.mxu0 0.0
    %92 = vmatpush2.msra.mxu0 0.0
    %93 = vmatprep.subr.mxu0 0.0
    %94 = vmatpush2.msra.mxu0 0.0
    %95 = vmatprep.subr.mxu0 0.0
    %96 = vmatpush2.msra.mxu0 0.0
    %97 = vmatprep.subr.mxu0 0.0
    %98 = vmatpush2.msra.mxu0 0.0
    %99 = vmatprep.subr.mxu0 0.0
    %100 = vmatpush2.msra.mxu0 0.0
    %101 = vmatprep.subr.mxu0 0.0
    %102 = vmatpush2.msra.mxu0 0.0
    %103 = vmatprep.subr.mxu0 0.0
    %104 = vmatpush2.msra.mxu0 0.0
    %105 = vmatprep.subr.mxu0 0.0
    %106 = vmatpush2.msra.mxu0 0.0
    %107 = vmatprep.subr.mxu0 0.0
    %108 = vmatpush2.msra.mxu0 0.0
    %109 = vmatprep.subr.mxu0 0.0
    %110 = vmatpush2.msra.mxu0 0.0
    %111 = vmatprep.subr.mxu0 0.0
    %112 = vmatpush2.msra.mxu0 0.0
    %113 = vmatprep.subr.mxu0 0.0
    %114 = vmatpush2.msra.mxu0 0.0
    %115 = vmatprep.subr.mxu0 0.0
    %116 = vmatpush2.msra.mxu0 0.0
    %117 = vmatprep.subr.mxu0 0.0
    %118 = vmatpush2.msra.mxu0 0.0
    %119 = vmatprep.subr.mxu0 0.0
    %120 = vmatpush2.msra.mxu0 0.0
    %121 = vmatprep.mubr.f32.mxu0 0.0
    %122 = vmatmul.mubr.f32.gmra.mxu0 %v55
    %v123 = vpop.f32.mrf.mxu0
    %v124 = vadd.f32 %v51, %v123
    %v125 = vpop.f32.mrf.mxu0
    %126 = vdwg.mxu0
    %127 = vst [vmem:[#allocation7] sm:$0xff] %v124
    // Predicated region
    $region22: #{linear.1} parent=1 // pred_check
      _
    $region23: #{linear.1} parent=1 // pred_check_branch
      %129 = sbr.rel (0) target = $region25
    $region24: #{linear.1} parent=1 // pred_region
      %s131 = ssub.s32 128, 128
      %132 = vsyncadd [#allocation4], %s131
      %s134 = sshll.u32 [#allocation7], 4
      %s135 = int_to_ptr.vmem [resolvable:$true] %s134
      %137 = dma.vmem_to_hbm [thread:$0]  %s135, 128, %s3, [#allocation4]
    $region25: #{linear.1} parent=1 // pred_fallthru
      _
    // Predicated region
    $region26: #{linear.1} parent=1 // pred_check
      _
    $region27: #{linear.1} parent=1 // pred_check_branch
      %139 = sbr.rel (0) target = $region29
    $region28: #{linear.1} parent=1 // pred_region
      %140 = dma.done [#allocation4], 128
    $region29: #{linear.1} parent=1 // pred_fallthru
      _
    %141 = vsyncpa [#allocation3], 1
    %142 = vsyncpa [#allocation6], 1
    %143 = vsyncpa [#allocation4], 1

</llo_original>
